<compile_context>
chip_gen: v7x
topology: tpu7x:2x2x1
jax: 0.10.0
libtpu: 0.0.40
codegen_flags: <defaults>
</compile_context>

<pallas_src>
import jax
import jax.numpy as jnp
from jax import lax
from jax.experimental import pallas as pl
from jax.experimental.pallas import tpu as pltpu


# --------------------------------------------------------------------------- #
# Kernel
# --------------------------------------------------------------------------- #
def ensembled_critic_kernel(xs_ref, xa_ref, w1s_ref, w1a_ref, b1_ref,
                            w2_ref, b2_ref, w3t_ref, b3_ref, out_ref):
    # xs_ref : (tb, Ds)          xa_ref : (tb, Da)
    # w1s_ref: (Ds, E*H)         w1a_ref: (Da, E*H)      b1_ref: (1, E*H)
    # w2_ref : (E*H, E*H) block-diagonal                 b2_ref: (1, E*H)
    # w3t_ref: (E, E*H) block rows                       b3_ref: (E, 1)
    # out_ref: (E, tb)   <- transposed, lane-dense output
    cdt = w1s_ref.dtype                      # MXU compute dtype (f32 or bf16)

    # Layer 1: fused concat -> two dots against the split W1.
    h = jnp.dot(xs_ref[...].astype(cdt), w1s_ref[...],
                preferred_element_type=jnp.float32)
    h = h + jnp.dot(xa_ref[...].astype(cdt), w1a_ref[...],
                    preferred_element_type=jnp.float32)
    h = jnp.maximum(h + b1_ref[...], 0.0)                     # f32 bias/ReLU

    # Layer 2: block-diagonal (E*H, E*H) matmul == per-critic (H, H) matmuls.
    h = jnp.dot(h.astype(cdt), w2_ref[...],
                preferred_element_type=jnp.float32)
    h = jnp.maximum(h + b2_ref[...], 0.0)

    # Layer 3: one tiny NT matmul producing (E, tb) directly (lane-dense store).
    qT = lax.dot_general(w3t_ref[...], h.astype(cdt),
                         dimension_numbers=(((1,), (1,)), ((), ())),
                         preferred_element_type=jnp.float32)
    out_ref[...] = (qT + b3_ref[...]).astype(out_ref.dtype)


# --------------------------------------------------------------------------- #
# Parameter folding (done once per parameter update, not per forward)
# --------------------------------------------------------------------------- #
def fold_params(params, state_dim, *, compute_dtype=jnp.float32):
    """Fold the ensemble dimension into the lane dimension (layout done once)."""
    w1, b1, w2, b2, w3, b3 = params
    E, D, H = w1.shape
    EH = E * H

    w1_f = jnp.transpose(w1, (1, 0, 2)).reshape(D, EH)          # (D, E*H)
    w1s = w1_f[:state_dim].astype(compute_dtype)                # (Ds, E*H)
    w1a = w1_f[state_dim:].astype(compute_dtype)                # (Da, E*H)
    b1_f = b1.reshape(1, EH).astype(jnp.float32)

    eye = jnp.eye(E, dtype=w2.dtype)
    w2_bd = (jnp.einsum('eij,ef->eifj', w2, eye)
             .reshape(EH, EH).astype(compute_dtype))            # block-diagonal
    b2_f = b2.reshape(1, EH).astype(jnp.float32)

    w3_sq = w3[:, :, 0]                                         # (E, H)
    w3t = (jnp.einsum('fe,eh->feh', jnp.eye(E, dtype=w3.dtype), w3_sq)
           .reshape(E, EH).astype(compute_dtype))               # (E, E*H) block rows
    b3_f = b3.reshape(E, 1).astype(jnp.float32)

    return (w1s, w1a, b1_f, w2_bd, b2_f, w3t, b3_f)


# --------------------------------------------------------------------------- #
# Wrapper
# --------------------------------------------------------------------------- #
def _pick_tile(batch, block_b, min_grid_steps):
    """Batch tile. When tiling (tb < B) the tile must be a multiple of 128
    because the batch axis is the LANE dim of the (E, tb) output block."""
    if min_grid_steps <= 1 and batch <= block_b:
        return batch
    target = -(-batch // max(1, min_grid_steps))     # ceil(B / steps)
    tb = min(block_b, target)
    tb = (tb // 128) * 128
    if tb < 128 or tb >= batch:
        return batch                                  # single full-batch tile
    return tb


def ensembled_critic_folded(state, action, folded, *, block_b=4096,
                            min_grid_steps=1):
    """Pallas forward on pre-folded params. Returns (num_critics, batch, 1)."""
    w1s, w1a, b1, w2_bd, b2, w3t, b3 = folded
    B, Ds = state.shape
    _, Da = action.shape
    EH = w2_bd.shape[0]
    E = w3t.shape[0]

    tb = _pick_tile(B, block_b, min_grid_steps)       # v7x: use min_grid_steps=2
    grid = (pl.cdiv(B, tb),)

    out = pl.pallas_call(
        ensembled_critic_kernel,
        out_shape=jax.ShapeDtypeStruct((E, B), jnp.float32),
        grid=grid,
        in_specs=[
            pl.BlockSpec((tb, Ds), lambda i: (i, 0)),   # state   (batch-tiled)
            pl.BlockSpec((tb, Da), lambda i: (i, 0)),   # action  (batch-tiled)
            pl.BlockSpec((Ds, EH), lambda i: (0, 0)),   # W1_state   (resident)
            pl.BlockSpec((Da, EH), lambda i: (0, 0)),   # W1_action  (resident)
            pl.BlockSpec((1, EH), lambda i: (0, 0)),    # b1
            pl.BlockSpec((EH, EH), lambda i: (0, 0)),   # W2 block-diagonal
            pl.BlockSpec((1, EH), lambda i: (0, 0)),    # b2
            pl.BlockSpec((E, EH), lambda i: (0, 0)),    # W3^T block rows
            pl.BlockSpec((E, 1), lambda i: (0, 0)),     # b3 column
        ],
        out_specs=pl.BlockSpec((E, tb), lambda i: (0, i)),   # lane-dense (E, tb)
        compiler_params=pltpu.CompilerParams(
            dimension_semantics=("parallel",)),              # batch axis
    )(state, action, w1s, w1a, b1, w2_bd, b2, w3t, b3)

    return out[:, :, None]                            # (E, B, 1): free reshape


def ensembled_critic(state, action, params, *, compute_dtype=jnp.float32,
                     block_b=4096, min_grid_steps=1):
    """Convenience wrapper: folds params then runs the fused kernel."""
    folded = fold_params(params, state.shape[1], compute_dtype=compute_dtype)
    return ensembled_critic_folded(state, action, folded,
                                   block_b=block_b, min_grid_steps=min_grid_steps)


# --------------------------------------------------------------------------- #
# Init + pure-JAX reference (PyTorch semantics)
# --------------------------------------------------------------------------- #
def init_params(key, state_dim, action_dim, hidden_dim, num_critics):
    """EnsembleLinear init: weight ~ trunc_normal(std=1/(2*sqrt(in))), bias=0."""
    def ens_linear(k, in_f, out_f):
        std = 1.0 / (2.0 * in_f ** 0.5)
        w = jax.random.truncated_normal(
            k, -2.0, 2.0, (num_critics, in_f, out_f), dtype=jnp.float32) * std
        b = jnp.zeros((num_critics, 1, out_f), dtype=jnp.float32)
        return w, b

    k1, k2, k3 = jax.random.split(key, 3)
    w1, b1 = ens_linear(k1, state_dim + action_dim, hidden_dim)
    w2, b2 = ens_linear(k2, hidden_dim, hidden_dim)
    w3, b3 = ens_linear(k3, hidden_dim, 1)
    return (w1, b1, w2, b2, w3, b3)


def reference_forward(state, action, params):
    w1, b1, w2, b2, w3, b3 = params
    x = jnp.concatenate([state, action], axis=1)              # (B, D)
    h = jnp.maximum(jnp.einsum('ij,bjk->bik', x, w1) + b1, 0.0)   # (E, B, H)
    h = jnp.maximum(jnp.einsum('bij,bjk->bik', h, w2) + b2, 0.0)  # (E, B, H)
    return jnp.einsum('bij,bjk->bik', h, w3) + b3             # (E, B, 1)


# --------------------------------------------------------------------------- #
# Demo / self-check
# --------------------------------------------------------------------------- #
if __name__ == "__main__":
    state_dim, action_dim = 12, 4                             # D = 16
    hidden_dim, num_critics = 32, 4                           # E*H = 128 lanes
    batch = 8

    key = jax.random.PRNGKey(0)
    k_params, k_state, k_action = jax.random.split(key, 3)

    params = init_params(k_params, state_dim, action_dim, hidden_dim, num_critics)
    state = jax.random.normal(k_state, (batch, state_dim), dtype=jnp.float32)
    action = jax.random.normal(k_action, (batch, action_dim), dtype=jnp.float32)

    ref = jax.block_until_ready(reference_forward(state, action, params))

    # f32 MXU path: exact match with the reference.
    out_f32 = jax.block_until_ready(
        ensembled_critic(state, action, params, compute_dtype=jnp.float32))
    assert out_f32.shape == (num_critics, batch, 1), out_f32.shape
    assert jnp.allclose(out_f32, ref, atol=1e-5, rtol=1e-5), "f32 mismatch"

    # bf16 MXU path (v6e/v7x fast path): looser tolerance, f32 accumulation.
    out_bf16 = jax.block_until_ready(
        ensembled_critic(state, action, params, compute_dtype=jnp.bfloat16))
    assert jnp.allclose(out_bf16, ref, atol=3e-2, rtol=3e-2), "bf16 mismatch"

    # Multi-tile path (forces grid > 1 with a partial last tile, tb = 128).
    bigB = 300
    ks, ka = jax.random.split(jax.random.PRNGKey(1))
    state_big = jax.random.normal(ks, (bigB, state_dim), dtype=jnp.float32)
    action_big = jax.random.normal(ka, (bigB, action_dim), dtype=jnp.float32)
    out_big = jax.block_until_ready(
        ensembled_critic(state_big, action_big, params,
                         compute_dtype=jnp.float32, block_b=128))
    ref_big = jax.block_until_ready(reference_forward(state_big, action_big, params))
    assert jnp.allclose(out_big, ref_big, atol=1e-5, rtol=1e-5), "tiled mismatch"

    print("KERNEL_OK")
</pallas_src>

<mosaic_0001>
module attributes {stable_mosaic.version = 11 : i64} {
  func.func @ensembled_critic_kernel(%arg0: i32, %arg1: memref<8x12xf32, #tpu.memory_space<vmem>>, %arg2: memref<8x4xf32, #tpu.memory_space<vmem>>, %arg3: memref<12x128xf32, #tpu.memory_space<vmem>>, %arg4: memref<4x128xf32, #tpu.memory_space<vmem>>, %arg5: memref<1x128xf32, #tpu.memory_space<vmem>>, %arg6: memref<128x128xf32, #tpu.memory_space<vmem>>, %arg7: memref<1x128xf32, #tpu.memory_space<vmem>>, %arg8: memref<4x128xf32, #tpu.memory_space<vmem>>, %arg9: memref<4x1xf32, #tpu.memory_space<vmem>>, %arg10: memref<4x8xf32, #tpu.memory_space<vmem>>) attributes {dimension_semantics = [#tpu.dimension_semantics<parallel>], iteration_bounds = array<i64: 1>, scalar_prefetch = 0 : i64, scratch_operands = 0 : i64, tpu.core_type = #tpu.core_type<tc>, window_params = [{transform_indices = @transform_0, window_bounds = array<i64: 8, 12>}, {transform_indices = @transform_1, window_bounds = array<i64: 8, 4>}, {pipeline_mode = #tpu.pipeline_mode<synchronous>, transform_indices = @transform_2, window_bounds = array<i64: 12, 128>}, {pipeline_mode = #tpu.pipeline_mode<synchronous>, transform_indices = @transform_3, window_bounds = array<i64: 4, 128>}, {pipeline_mode = #tpu.pipeline_mode<synchronous>, transform_indices = @transform_4, window_bounds = array<i64: 1, 128>}, {pipeline_mode = #tpu.pipeline_mode<synchronous>, transform_indices = @transform_5, window_bounds = array<i64: 128, 128>}, {pipeline_mode = #tpu.pipeline_mode<synchronous>, transform_indices = @transform_6, window_bounds = array<i64: 1, 128>}, {pipeline_mode = #tpu.pipeline_mode<synchronous>, transform_indices = @transform_7, window_bounds = array<i64: 4, 128>}, {pipeline_mode = #tpu.pipeline_mode<synchronous>, transform_indices = @transform_8, window_bounds = array<i64: 4, 1>}, {transform_indices = @transform_9, window_bounds = array<i64: 4, 8>}]} {
    %c0 = arith.constant 0 : index
    %c0_0 = arith.constant 0 : index
    %0 = vector.load %arg1[%c0, %c0_0] : memref<8x12xf32, #tpu.memory_space<vmem>>, vector<8x12xf32>
    %c0_1 = arith.constant 0 : index
    %c0_2 = arith.constant 0 : index
    %1 = vector.load %arg3[%c0_1, %c0_2] : memref<12x128xf32, #tpu.memory_space<vmem>>, vector<12x128xf32>
    %cst = arith.constant dense<0.000000e+00> : vector<8x128xf32>
    %2 = tpu.matmul %0, %1, %cst {dimension_numbers = #tpu.dot_dimension_numbers<[1], [0], [0], [1], [0, 0, 1, 1], [], []>} : vector<8x12xf32>, vector<12x128xf32>, vector<8x128xf32> -> vector<8x128xf32>
    %c0_3 = arith.constant 0 : index
    %c0_4 = arith.constant 0 : index
    %3 = vector.load %arg2[%c0_3, %c0_4] : memref<8x4xf32, #tpu.memory_space<vmem>>, vector<8x4xf32>
    %c0_5 = arith.constant 0 : index
    %c0_6 = arith.constant 0 : index
    %4 = vector.load %arg4[%c0_5, %c0_6] : memref<4x128xf32, #tpu.memory_space<vmem>>, vector<4x128xf32>
    %cst_7 = arith.constant dense<0.000000e+00> : vector<8x128xf32>
    %5 = tpu.matmul %3, %4, %cst_7 {dimension_numbers = #tpu.dot_dimension_numbers<[1], [0], [0], [1], [0, 0, 1, 1], [], []>} : vector<8x4xf32>, vector<4x128xf32>, vector<8x128xf32> -> vector<8x128xf32>
    %6 = arith.addf %2, %5 : vector<8x128xf32>
    %c0_8 = arith.constant 0 : index
    %c0_9 = arith.constant 0 : index
    %7 = vector.load %arg5[%c0_8, %c0_9] : memref<1x128xf32, #tpu.memory_space<vmem>>, vector<1x128xf32>
    %8 = vector.broadcast %7 : vector<1x128xf32> to vector<8x128xf32>
    %9 = arith.addf %6, %8 : vector<8x128xf32>
    %cst_10 = arith.constant 0.000000e+00 : f32
    %10 = vector.broadcast %cst_10 : f32 to vector<8x128xf32>
    %11 = arith.maximumf %9, %10 : vector<8x128xf32>
    %c0_11 = arith.constant 0 : index
    %c0_12 = arith.constant 0 : index
    %12 = vector.load %arg6[%c0_11, %c0_12] : memref<128x128xf32, #tpu.memory_space<vmem>>, vector<128x128xf32>
    %cst_13 = arith.constant dense<0.000000e+00> : vector<8x128xf32>
    %13 = tpu.matmul %11, %12, %cst_13 {dimension_numbers = #tpu.dot_dimension_numbers<[1], [0], [0], [1], [0, 0, 1, 1], [], []>} : vector<8x128xf32>, vector<128x128xf32>, vector<8x128xf32> -> vector<8x128xf32>
    %c0_14 = arith.constant 0 : index
    %c0_15 = arith.constant 0 : index
    %14 = vector.load %arg7[%c0_14, %c0_15] : memref<1x128xf32, #tpu.memory_space<vmem>>, vector<1x128xf32>
    %15 = vector.broadcast %14 : vector<1x128xf32> to vector<8x128xf32>
    %16 = arith.addf %13, %15 : vector<8x128xf32>
    %cst_16 = arith.constant 0.000000e+00 : f32
    %17 = vector.broadcast %cst_16 : f32 to vector<8x128xf32>
    %18 = arith.maximumf %16, %17 : vector<8x128xf32>
    %c0_17 = arith.constant 0 : index
    %c0_18 = arith.constant 0 : index
    %19 = vector.load %arg8[%c0_17, %c0_18] : memref<4x128xf32, #tpu.memory_space<vmem>>, vector<4x128xf32>
    %cst_19 = arith.constant dense<0.000000e+00> : vector<4x8xf32>
    %20 = tpu.matmul %19, %18, %cst_19 {dimension_numbers = #tpu.dot_dimension_numbers<[1], [1], [0], [0], [0, 0, 1, 0], [], []>} : vector<4x128xf32>, vector<8x128xf32>, vector<4x8xf32> -> vector<4x8xf32>
    %c0_20 = arith.constant 0 : index
    %c0_21 = arith.constant 0 : index
    %21 = vector.load %arg9[%c0_20, %c0_21] : memref<4x1xf32, #tpu.memory_space<vmem>>, vector<4x1xf32>
    %22 = vector.broadcast %21 : vector<4x1xf32> to vector<4x8xf32>
    %23 = arith.addf %20, %22 : vector<4x8xf32>
    %c0_22 = arith.constant 0 : index
    %c0_23 = arith.constant 0 : index
    %24 = vector.load %arg10[%c0_22, %c0_23] : memref<4x8xf32, #tpu.memory_space<vmem>>, vector<4x8xf32>
    tpu.vector_store %arg10[%c0_22, %c0_23], %23 {strides = array<i32>} : memref<4x8xf32, #tpu.memory_space<vmem>>, vector<4x8xf32>,
    return
  }
  func.func @transform_0(%arg0: i32) -> (i32, i32) {
    %c0_i32 = arith.constant 0 : i32
    %c0_i32_0 = arith.constant 0 : i32
    return %arg0, %c0_i32 : i32, i32
  }
  func.func @transform_1(%arg0: i32) -> (i32, i32) {
    %c0_i32 = arith.constant 0 : i32
    %c0_i32_0 = arith.constant 0 : i32
    return %arg0, %c0_i32 : i32, i32
  }
  func.func @transform_2(%arg0: i32) -> (i32, i32) {
    %c0_i32 = arith.constant 0 : i32
    %c0_i32_0 = arith.constant 0 : i32
    %c0_i32_1 = arith.constant 0 : i32
    return %c0_i32, %c0_i32_0 : i32, i32
  }
  func.func @transform_3(%arg0: i32) -> (i32, i32) {
    %c0_i32 = arith.constant 0 : i32
    %c0_i32_0 = arith.constant 0 : i32
    %c0_i32_1 = arith.constant 0 : i32
    return %c0_i32, %c0_i32_0 : i32, i32
  }
  func.func @transform_4(%arg0: i32) -> (i32, i32) {
    %c0_i32 = arith.constant 0 : i32
    %c0_i32_0 = arith.constant 0 : i32
    %c0_i32_1 = arith.constant 0 : i32
    return %c0_i32, %c0_i32_0 : i32, i32
  }
  func.func @transform_5(%arg0: i32) -> (i32, i32) {
    %c0_i32 = arith.constant 0 : i32
    %c0_i32_0 = arith.constant 0 : i32
    %c0_i32_1 = arith.constant 0 : i32
    return %c0_i32, %c0_i32_0 : i32, i32
  }
  func.func @transform_6(%arg0: i32) -> (i32, i32) {
    %c0_i32 = arith.constant 0 : i32
    %c0_i32_0 = arith.constant 0 : i32
    %c0_i32_1 = arith.constant 0 : i32
    return %c0_i32, %c0_i32_0 : i32, i32
  }
  func.func @transform_7(%arg0: i32) -> (i32, i32) {
    %c0_i32 = arith.constant 0 : i32
    %c0_i32_0 = arith.constant 0 : i32
    %c0_i32_1 = arith.constant 0 : i32
    return %c0_i32, %c0_i32_0 : i32, i32
  }
  func.func @transform_8(%arg0: i32) -> (i32, i32) {
    %c0_i32 = arith.constant 0 : i32
    %c0_i32_0 = arith.constant 0 : i32
    %c0_i32_1 = arith.constant 0 : i32
    return %c0_i32, %c0_i32_0 : i32, i32
  }
  func.func @transform_9(%arg0: i32) -> (i32, i32) {
    %c0_i32 = arith.constant 0 : i32
    %c0_i32_0 = arith.constant 0 : i32
    return %c0_i32, %arg0 : i32, i32
  }
}

</mosaic_0001>

<llo_original>
// kernel: tpu_custom_call.1
$region0: #{tpu_custom_call.1}
  #allocation0 [shape = 'u32[]', space=smem, size = 0x4, offset = 0x4, fixed_abs, tag = 'smem constant byte address 0x4 - core index']
  #allocation1 [shape = 'u32[144,128]{1,0:T(1,128)}', space=vmem, size = 0x12000, scoped, tag = 'internal scratch']
  %s0 = inlined_call_operand.vmem [shape: f32[8,12], index: 0, kind: input, shape index: {}]
  %s1 = inlined_call_operand.vmem [shape: f32[8,4], index: 1, kind: input, shape index: {}]
  %s2 = inlined_call_operand.vmem [shape: f32[12,128], index: 2, kind: input, shape index: {}]
  %s3 = inlined_call_operand.vmem [shape: f32[4,128], index: 3, kind: input, shape index: {}]
  %s4 = inlined_call_operand.hbm [shape: f32[1,128], index: 4, kind: input, shape index: {}]
  %s5 = inlined_call_operand.hbm [shape: f32[128,128], index: 5, kind: input, shape index: {}]
  %s6 = inlined_call_operand.vmem [shape: f32[1,128], index: 6, kind: input, shape index: {}]
  %s7 = inlined_call_operand.vmem [shape: f32[4,128], index: 7, kind: input, shape index: {}]
  %s8 = inlined_call_operand.vmem [shape: f32[4,1], index: 8, kind: input, shape index: {}]
  %s9 = inlined_call_operand.hbm [shape: f32[4,8], index: 9, kind: output, shape index: {}]
  %s10 = sld [smem:[#allocation0]]
  $region54: #{tpu_custom_call.1} parent=0
    _
  %s12 = ssub.s32 1, %s10
  %s13 = scalar_select 0, %s12, %s10
  $region1: #{tpu_custom_call.1} parent=0
    #allocation2 [shape = 'u8[512]{0}', space=vmem, size = 0x400, scoped, tag = 'input window, operand 4, single buffered']
    #allocation3 [shape = 's32[1]{0}', space=sflag, size = 0x4, scoped, tag = 'scoped memory for tpu_custom_call.1']
    #allocation4 [shape = 's32[1]{0}', space=sflag, size = 0x4, scoped, tag = 'scoped memory for tpu_custom_call.1']
    #allocation5 [shape = 'u8[65536]{0}', space=vmem, size = 0x10000, scoped, tag = 'input window, operand 5, single buffered']
    #allocation6 [shape = 's32[1]{0}', space=sflag, size = 0x4, scoped, tag = 'scoped memory for tpu_custom_call.1']
    #allocation7 [shape = 'u8[2048]{0}', space=vmem, size = 0x800, scoped, tag = 'output window, operand 0, single buffered']
    %14 = vsyncpa [#allocation3], 0
    %15 = vsyncpa [#allocation6], 0
    %16 = vsyncpa [#allocation4], 0
    // Predicated region
    $region2: #{tpu_custom_call.1} parent=1 // pred_check
      _
    $region3: #{tpu_custom_call.1} parent=1 // pred_check_branch
      %18 = sbr.rel (0) target = $region5
    $region4: #{tpu_custom_call.1} parent=1 // pred_region
      _
    $region5: #{tpu_custom_call.1} parent=1 // pred_fallthru
      _
    // Predicated region
    $region6: #{tpu_custom_call.1} parent=1 // pred_check
      _
    $region7: #{tpu_custom_call.1} parent=1 // pred_check_branch
      %20 = sbr.rel (0) target = $region9
    $region8: #{tpu_custom_call.1} parent=1 // pred_region
      _
    $region9: #{tpu_custom_call.1} parent=1 // pred_fallthru
      _
    // Predicated region
    $region10: #{tpu_custom_call.1} parent=1 // pred_check
      _
    $region11: #{tpu_custom_call.1} parent=1 // pred_check_branch
      %22 = sbr.rel (0) target = $region13
    $region12: #{tpu_custom_call.1} parent=1 // pred_region
      _
    $region13: #{tpu_custom_call.1} parent=1 // pred_fallthru
      _
    // Predicated region
    $region14: #{tpu_custom_call.1} parent=1 // pred_check
      _
    $region15: #{tpu_custom_call.1} parent=1 // pred_check_branch
      %24 = sbr.rel (0) target = $region17
    $region16: #{tpu_custom_call.1} parent=1 // pred_region
      _
    $region17: #{tpu_custom_call.1} parent=1 // pred_fallthru
      _
    // Predicated region
    $region18: #{tpu_custom_call.1} parent=1 // pred_check
      _
    $region19: #{tpu_custom_call.1} parent=1 // pred_check_branch
      %26 = sbr.rel (0) target = $region21
    $region20: #{tpu_custom_call.1} parent=1 // pred_region
      %s28 = ssub.s32 16, 16
      %29 = vsyncadd [#allocation3], %s28
      %s31 = sshll.u32 [#allocation2], 4
      %s32 = int_to_ptr.vmem [resolvable:$true] %s31
      %34 = dma.hbm_to_vmem [thread:$0]  %s4, 16, %s32, [#allocation3]
    $region21: #{tpu_custom_call.1} parent=1 // pred_fallthru
      _
    // Predicated region
    $region22: #{tpu_custom_call.1} parent=1 // pred_check
      _
    $region23: #{tpu_custom_call.1} parent=1 // pred_check_branch
      %36 = sbr.rel (0) target = $region25
    $region24: #{tpu_custom_call.1} parent=1 // pred_region
      %s38 = ssub.s32 2048, 2048
      %39 = vsyncadd [#allocation6], %s38
      %s40 = sshll.u32 [#allocation5], 4
      %s41 = int_to_ptr.vmem [resolvable:$true] %s40
      %46 = dma.hbm_to_vmem [thread:$0]  %s5, 2048, %s41, [#allocation6], 128, 128, 8
    $region25: #{tpu_custom_call.1} parent=1 // pred_fallthru
      _
    // Predicated region
    $region26: #{tpu_custom_call.1} parent=1 // pred_check
      _
    $region27: #{tpu_custom_call.1} parent=1 // pred_check_branch
      %48 = sbr.rel (0) target = $region29
    $region28: #{tpu_custom_call.1} parent=1 // pred_region
      _
    $region29: #{tpu_custom_call.1} parent=1 // pred_fallthru
      _
    // Predicated region
    $region30: #{tpu_custom_call.1} parent=1 // pred_check
      _
    $region31: #{tpu_custom_call.1} parent=1 // pred_check_branch
      %50 = sbr.rel (0) target = $region33
    $region32: #{tpu_custom_call.1} parent=1 // pred_region
      _
    $region33: #{tpu_custom_call.1} parent=1 // pred_fallthru
      _
    // Predicated region
    $region34: #{tpu_custom_call.1} parent=1 // pred_check
      _
    $region35: #{tpu_custom_call.1} parent=1 // pred_check_branch
      %52 = sbr.rel (0) target = $region37
    $region36: #{tpu_custom_call.1} parent=1 // pred_region
      _
    $region37: #{tpu_custom_call.1} parent=1 // pred_fallthru
      _
    // Predicated region
    $region38: #{tpu_custom_call.1} parent=1 // pred_check
      _
    $region39: #{tpu_custom_call.1} parent=1 // pred_check_branch
      %54 = sbr.rel (0) target = $region41
    $region40: #{tpu_custom_call.1} parent=1 // pred_region
      %55 = dma.done [#allocation3], 16
    $region41: #{tpu_custom_call.1} parent=1 // pred_fallthru
      _
    // Predicated region
    $region42: #{tpu_custom_call.1} parent=1 // pred_check
      _
    $region43: #{tpu_custom_call.1} parent=1 // pred_check_branch
      %57 = sbr.rel (0) target = $region45
    $region44: #{tpu_custom_call.1} parent=1 // pred_region
      %58 = dma.done [#allocation6], 2048
    $region45: #{tpu_custom_call.1} parent=1 // pred_fallthru
      _
    %v59 = vld [vmem:[%s0] sm:$0xff]
    %v60 = vld [vmem:[%s2] sm:$0xff]
    %v61 = vld [vmem:[%s2 + $0x8] sm:$0xf]
    %v62 = vld [vmem:[%s1] sm:$0xff]
    %v63 = vld [vmem:[%s3] sm:$0xf]
    %vm64 = vcmask 31744
    %v66 = vsel %vm64, %v62, 0
    %vm68 = vcmask 1043456
    %v70 = vsel %vm68, %v63, 0
    %72 = vmatprep.subr.mxu0 0.0
    %73 = vmatpush1.msra.mxu0 %v70
    %74 = vmatprep.subr.mxu0 0.0
    %75 = vmatpush1.msra.mxu0 0.0
    %76 = vmatprep.subr.mxu0 0.0
    %77 = vmatpush1.msra.mxu0 0.0
    %78 = vmatprep.subr.mxu0 0.0
    %79 = vmatpush1.msra.mxu0 0.0
    %80 = vmatprep.subr.mxu0 0.0
    %81 = vmatpush1.msra.mxu0 0.0
    %82 = vmatprep.subr.mxu0 0.0
    %83 = vmatpush1.msra.mxu0 0.0
    %84 = vmatprep.subr.mxu0 0.0
    %85 = vmatpush1.msra.mxu0 0.0
    %86 = vmatprep.subr.mxu0 0.0
    %87 = vmatpush1.msra.mxu0 0.0
    %88 = vmatprep.subr.mxu0 0.0
    %89 = vmatpush1.msra.mxu0 0.0
    %90 = vmatprep.subr.mxu0 0.0
    %91 = vmatpush1.msra.mxu0 0.0
    %92 = vmatprep.subr.mxu0 0.0
    %93 = vmatpush1.msra.mxu0 0.0
    %94 = vmatprep.subr.mxu0 0.0
    %95 = vmatpush1.msra.mxu0 0.0
    %96 = vmatprep.subr.mxu0 0.0
    %97 = vmatpush1.msra.mxu0 0.0
    %98 = vmatprep.subr.mxu0 0.0
    %99 = vmatpush1.msra.mxu0 0.0
    %100 = vmatprep.subr.mxu0 0.0
    %101 = vmatpush1.msra.mxu0 0.0
    %102 = vmatprep.subr.mxu0 0.0
    %103 = vmatpush1.msra.mxu0 0.0
    %104 = vmatprep.subr.mxu0 0.0
    %105 = vmatpush1.msra.mxu0 0.0
    %106 = vmatprep.subr.mxu0 0.0
    %107 = vmatpush1.msra.mxu0 0.0
    %108 = vmatprep.subr.mxu0 0.0
    %109 = vmatpush1.msra.mxu0 0.0
    %110 = vmatprep.subr.mxu0 0.0
    %111 = vmatpush1.msra.mxu0 0.0
    %112 = vmatprep.subr.mxu0 0.0
    %113 = vmatpush1.msra.mxu0 0.0
    %114 = vmatprep.subr.mxu0 0.0
    %115 = vmatpush1.msra.mxu0 0.0
    %116 = vmatprep.subr.mxu0 0.0
    %117 = vmatpush1.msra.mxu0 0.0
    %118 = vmatprep.subr.mxu0 0.0
    %119 = vmatpush1.msra.mxu0 0.0
    %120 = vmatprep.subr.mxu0 0.0
    %121 = vmatpush1.msra.mxu0 0.0
    %122 = vmatprep.subr.mxu0 0.0
    %123 = vmatpush1.msra.mxu0 0.0
    %124 = vmatprep.subr.mxu0 0.0
    %125 = vmatpush1.msra.mxu0 0.0
    %126 = vmatprep.subr.mxu0 0.0
    %127 = vmatpush1.msra.mxu0 0.0
    %128 = vmatprep.subr.mxu0 0.0
    %129 = vmatpush1.msra.mxu0 0.0
    %130 = vmatprep.subr.mxu0 0.0
    %131 = vmatpush1.msra.mxu0 0.0
    %132 = vmatprep.subr.mxu0 0.0
    %133 = vmatpush1.msra.mxu0 0.0
    %134 = vmatprep.subr.mxu0 0.0
    %135 = vmatpush1.msra.mxu0 0.0
    %136 = vmatprep.mubr.f32.mxu0 0.0
    %137 = vmatmul.mubr.f32.gmra.mrb[0].mxu0 %v66
    %v138 = vpop.f32.mrb[0].mxu0
    %v139 = vadd.f32 0.0, %v138
    %v140 = vpop.f32.mrb[0].mxu0
    %141 = vdwg.mxu0
    %vm142 = vcmask 97280
    %v144 = vsel %vm142, %v59, 0
    %v147 = vsel %vm68, %v61, 0
    %149 = vmatprep.subr.mxu0 0.0
    %150 = vmatpush1.msra.mxu0 %v60
    %151 = vmatprep.subr.mxu0 0.0
    %152 = vmatpush1.msra.mxu0 %v147
    %153 = vmatprep.subr.mxu0 0.0
    %154 = vmatpush1.msra.mxu0 0.0
    %155 = vmatprep.subr.mxu0 0.0
    %156 = vmatpush1.msra.mxu0 0.0
    %157 = vmatprep.subr.mxu0 0.0
    %158 = vmatpush1.msra.mxu0 0.0
    %159 = vmatprep.subr.mxu0 0.0
    %160 = vmatpush1.msra.mxu0 0.0
    %161 = vmatprep.subr.mxu0 0.0
    %162 = vmatpush1.msra.mxu0 0.0
    %163 = vmatprep.subr.mxu0 0.0
    %164 = vmatpush1.msra.mxu0 0.0
    %165 = vmatprep.subr.mxu0 0.0
    %166 = vmatpush1.msra.mxu0 0.0
    %167 = vmatprep.subr.mxu0 0.0
    %168 = vmatpush1.msra.mxu0 0.0
    %169 = vmatprep.subr.mxu0 0.0
    %170 = vmatpush1.msra.mxu0 0.0
    %171 = vmatprep.subr.mxu0 0.0
    %172 = vmatpush1.msra.mxu0 0.0
    %173 = vmatprep.subr.mxu0 0.0
    %174 = vmatpush1.msra.mxu0 0.0
    %175 = vmatprep.subr.mxu0 0.0
    %176 = vmatpush1.msra.mxu0 0.0
    %177 = vmatprep.subr.mxu0 0.0
    %178 = vmatpush1.msra.mxu0 0.0
    %179 = vmatprep.subr.mxu0 0.0
    %180 = vmatpush1.msra.mxu0 0.0
    %181 = vmatprep.subr.mxu0 0.0
    %182 = vmatpush1.msra.mxu0 0.0
    %183 = vmatprep.subr.mxu0 0.0
    %184 = vmatpush1.msra.mxu0 0.0
    %185 = vmatprep.subr.mxu0 0.0
    %186 = vmatpush1.msra.mxu0 0.0
    %187 = vmatprep.subr.mxu0 0.0
    %188 = vmatpush1.msra.mxu0 0.0
    %189 = vmatprep.subr.mxu0 0.0
    %190 = vmatpush1.msra.mxu0 0.0
    %191 = vmatprep.subr.mxu0 0.0
    %192 = vmatpush1.msra.mxu0 0.0
    %193 = vmatprep.subr.mxu0 0.0
    %194 = vmatpush1.msra.mxu0 0.0
    %195 = vmatprep.subr.mxu0 0.0
    %196 = vmatpush1.msra.mxu0 0.0
    %197 = vmatprep.subr.mxu0 0.0
    %198 = vmatpush1.msra.mxu0 0.0
    %199 = vmatprep.subr.mxu0 0.0
    %200 = vmatpush1.msra.mxu0 0.0
    %201 = vmatprep.subr.mxu0 0.0
    %202 = vmatpush1.msra.mxu0 0.0
    %203 = vmatprep.subr.mxu0 0.0
    %204 = vmatpush1.msra.mxu0 0.0
    %205 = vmatprep.subr.mxu0 0.0
    %206 = vmatpush1.msra.mxu0 0.0
    %207 = vmatprep.subr.mxu0 0.0
    %208 = vmatpush1.msra.mxu0 0.0
    %209 = vmatprep.subr.mxu0 0.0
    %210 = vmatpush1.msra.mxu0 0.0
    %211 = vmatprep.subr.mxu0 0.0
    %212 = vmatpush1.msra.mxu0 0.0
    %213 = vmatprep.mubr.f32.mxu0 0.0
    %214 = vmatmul.mubr.f32.gmra.mrb[0].mxu0 %v144
    %v215 = vpop.f32.mrb[0].mxu0
    %v216 = vadd.f32 %v139, %v215
    %v217 = vpop.f32.mrb[0].mxu0
    %218 = vdwg.mxu0
    %v219 = vld [vmem:[#allocation2] sm:$0x1]
    %v221 = vlaneseq
    %v222 = vshrl.u32 %v221, 7
    %v223 = vsub.s32 0, %v222
    %v224 = vrot.slane %v219, %v223
    %v226 = vadd.f32 %v216, %v224
    %v227 = vmax.f32 %v226, 0.0
    %v228 = vld [vmem:[#allocation5] sm:$0xff]
    %v229 = vld [vmem:[#allocation5 + $0x8] sm:$0xff]
    %v230 = vld [vmem:[#allocation5 + $0x10] sm:$0xff]
    %v231 = vld [vmem:[#allocation5 + $0x18] sm:$0xff]
    %v232 = vld [vmem:[#allocation5 + $0x20] sm:$0xff]
    %v233 = vld [vmem:[#allocation5 + $0x28] sm:$0xff]
    %v234 = vld [vmem:[#allocation5 + $0x30] sm:$0xff]
    %v235 = vld [vmem:[#allocation5 + $0x38] sm:$0xff]
    %v236 = vld [vmem:[#allocation5 + $0x40] sm:$0xff]
    %v237 = vld [vmem:[#allocation5 + $0x48] sm:$0xff]
    %v238 = vld [vmem:[#allocation5 + $0x50] sm:$0xff]
    %v239 = vld [vmem:[#allocation5 + $0x58] sm:$0xff]
    %v240 = vld [vmem:[#allocation5 + $0x60] sm:$0xff]
    %v241 = vld [vmem:[#allocation5 + $0x68] sm:$0xff]
    %v242 = vld [vmem:[#allocation5 + $0x70] sm:$0xff]
    %v243 = vld [vmem:[#allocation5 + $0x78] sm:$0xff]
    %v244 = vld [vmem:[%s6] sm:$0x1]
    %v246 = vlaneseq
    %v247 = vshrl.u32 %v246, 7
    %v248 = vsub.s32 0, %v247
    %v249 = vrot.slane %v244, %v248
    %251 = vmatprep.subr.mxu0 0.0
    %252 = vmatpush1.msra.mxu0 %v228
    %253 = vmatprep.subr.mxu0 0.0
    %254 = vmatpush1.msra.mxu0 %v229
    %255 = vmatprep.subr.mxu0 0.0
    %256 = vmatpush1.msra.mxu0 %v230
    %257 = vmatprep.subr.mxu0 0.0
    %258 = vmatpush1.msra.mxu0 %v231
    %259 = vmatprep.subr.mxu0 0.0
    %260 = vmatpush1.msra.mxu0 %v232
    %261 = vmatprep.subr.mxu0 0.0
    %262 = vmatpush1.msra.mxu0 %v233
    %263 = vmatprep.subr.mxu0 0.0
    %264 = vmatpush1.msra.mxu0 %v234
    %265 = vmatprep.subr.mxu0 0.0
    %266 = vmatpush1.msra.mxu0 %v235
    %267 = vmatprep.subr.mxu0 0.0
    %268 = vmatpush1.msra.mxu0 %v236
    %269 = vmatprep.subr.mxu0 0.0
    %270 = vmatpush1.msra.mxu0 %v237
    %271 = vmatprep.subr.mxu0 0.0
    %272 = vmatpush1.msra.mxu0 %v238
    %273 = vmatprep.subr.mxu0 0.0
    %274 = vmatpush1.msra.mxu0 %v239
    %275 = vmatprep.subr.mxu0 0.0
    %276 = vmatpush1.msra.mxu0 %v240
    %277 = vmatprep.subr.mxu0 0.0
    %278 = vmatpush1.msra.mxu0 %v241
    %279 = vmatprep.subr.mxu0 0.0
    %280 = vmatpush1.msra.mxu0 %v242
    %281 = vmatprep.subr.mxu0 0.0
    %282 = vmatpush1.msra.mxu0 %v243
    %283 = vmatprep.subr.mxu0 0.0
    %284 = vmatpush1.msra.mxu0 0.0
    %285 = vmatprep.subr.mxu0 0.0
    %286 = vmatpush1.msra.mxu0 0.0
    %287 = vmatprep.subr.mxu0 0.0
    %288 = vmatpush1.msra.mxu0 0.0
    %289 = vmatprep.subr.mxu0 0.0
    %290 = vmatpush1.msra.mxu0 0.0
    %291 = vmatprep.subr.mxu0 0.0
    %292 = vmatpush1.msra.mxu0 0.0
    %293 = vmatprep.subr.mxu0 0.0
    %294 = vmatpush1.msra.mxu0 0.0
    %295 = vmatprep.subr.mxu0 0.0
    %296 = vmatpush1.msra.mxu0 0.0
    %297 = vmatprep.subr.mxu0 0.0
    %298 = vmatpush1.msra.mxu0 0.0
    %299 = vmatprep.subr.mxu0 0.0
    %300 = vmatpush1.msra.mxu0 0.0
    %301 = vmatprep.subr.mxu0 0.0
    %302 = vmatpush1.msra.mxu0 0.0
    %303 = vmatprep.subr.mxu0 0.0
    %304 = vmatpush1.msra.mxu0 0.0
    %305 = vmatprep.subr.mxu0 0.0
    %306 = vmatpush1.msra.mxu0 0.0
    %307 = vmatprep.subr.mxu0 0.0
    %308 = vmatpush1.msra.mxu0 0.0
    %309 = vmatprep.subr.mxu0 0.0
    %310 = vmatpush1.msra.mxu0 0.0
    %311 = vmatprep.subr.mxu0 0.0
    %312 = vmatpush1.msra.mxu0 0.0
    %313 = vmatprep.subr.mxu0 0.0
    %314 = vmatpush1.msra.mxu0 0.0
    %315 = vmatprep.mubr.f32.mxu0 0.0
    %316 = vmatmul.mubr.f32.gmra.mrb[0].mxu0 %v227
    %v317 = vpop.f32.mrb[0].mxu0
    %v318 = vadd.f32 %v249, %v317
    %v319 = vpop.f32.mrb[0].mxu0
    %320 = vdwg.mxu0
    %v321 = vmax.f32 %v318, 0.0
    %v322 = vld [vmem:[%s7] sm:$0xf]
    %v323 = vld [vmem:[%s8] sm:$0xf]
    %325 = vset.pattern.permute.xlu0 0
    %326 = vperm.xlu0 %325, %v323
    %v327 = vpop.permute.xlu0 %326
    %329 = vmatprep.subr.mxu0 0.0
    %330 = vmatpush1.xpose.msra.mxu0 %v321
    %331 = vmatprep.subr.mxu0 0.0
    %332 = vmatpush1.xpose.msra.mxu0 0.0
    %333 = vmatprep.subr.mxu0 0.0
    %334 = vmatpush1.xpose.msra.mxu0 0.0
    %335 = vmatprep.subr.mxu0 0.0
    %336 = vmatpush1.xpose.msra.mxu0 0.0
    %337 = vmatprep.subr.mxu0 0.0
    %338 = vmatpush1.xpose.msra.mxu0 0.0
    %339 = vmatprep.subr.mxu0 0.0
    %340 = vmatpush1.xpose.msra.mxu0 0.0
    %341 = vmatprep.subr.mxu0 0.0
    %342 = vmatpush1.xpose.msra.mxu0 0.0
    %343 = vmatprep.subr.mxu0 0.0
    %344 = vmatpush1.xpose.msra.mxu0 0.0
    %345 = vmatprep.subr.mxu0 0.0
    %346 = vmatpush1.xpose.msra.mxu0 0.0
    %347 = vmatprep.subr.mxu0 0.0
    %348 = vmatpush1.xpose.msra.mxu0 0.0
    %349 = vmatprep.subr.mxu0 0.0
    %350 = vmatpush1.xpose.msra.mxu0 0.0
    %351 = vmatprep.subr.mxu0 0.0
    %352 = vmatpush1.xpose.msra.mxu0 0.0
    %353 = vmatprep.subr.mxu0 0.0
    %354 = vmatpush1.xpose.msra.mxu0 0.0
    %355 = vmatprep.subr.mxu0 0.0
    %356 = vmatpush1.xpose.msra.mxu0 0.0
    %357 = vmatprep.subr.mxu0 0.0
    %358 = vmatpush1.xpose.msra.mxu0 0.0
    %359 = vmatprep.subr.mxu0 0.0
    %360 = vmatpush1.xpose.msra.mxu0 0.0
    %361 = vmatprep.subr.mxu0 0.0
    %362 = vmatpush1.xpose.msra.mxu0 0.0
    %363 = vmatprep.subr.mxu0 0.0
    %364 = vmatpush1.xpose.msra.mxu0 0.0
    %365 = vmatprep.subr.mxu0 0.0
    %366 = vmatpush1.xpose.msra.mxu0 0.0
    %367 = vmatprep.subr.mxu0 0.0
    %368 = vmatpush1.xpose.msra.mxu0 0.0
    %369 = vmatprep.subr.mxu0 0.0
    %370 = vmatpush1.xpose.msra.mxu0 0.0
    %371 = vmatprep.subr.mxu0 0.0
    %372 = vmatpush1.xpose.msra.mxu0 0.0
    %373 = vmatprep.subr.mxu0 0.0
    %374 = vmatpush1.xpose.msra.mxu0 0.0
    %375 = vmatprep.subr.mxu0 0.0
    %376 = vmatpush1.xpose.msra.mxu0 0.0
    %377 = vmatprep.subr.mxu0 0.0
    %378 = vmatpush1.xpose.msra.mxu0 0.0
    %379 = vmatprep.subr.mxu0 0.0
    %380 = vmatpush1.xpose.msra.mxu0 0.0
    %381 = vmatprep.subr.mxu0 0.0
    %382 = vmatpush1.xpose.msra.mxu0 0.0
    %383 = vmatprep.subr.mxu0 0.0
    %384 = vmatpush1.xpose.msra.mxu0 0.0
    %385 = vmatprep.subr.mxu0 0.0
    %386 = vmatpush1.xpose.msra.mxu0 0.0
    %387 = vmatprep.subr.mxu0 0.0
    %388 = vmatpush1.xpose.msra.mxu0 0.0
    %389 = vmatprep.subr.mxu0 0.0
    %390 = vmatpush1.xpose.msra.mxu0 0.0
    %391 = vmatprep.subr.mxu0 0.0
    %392 = vmatpush1.xpose.msra.mxu0 0.0
    %393 = vmatprep.mubr.f32.mxu0 0.0
    %394 = vmatmul.mubr.f32.gmra.mrb[0].mxu0 %v322
    %v395 = vpop.f32.mrb[0].mxu0
    %v396 = vadd.f32 %v327, %v395
    %v397 = vpop.f32.mrb[0].mxu0
    %398 = vdwg.mxu0
    %vm399 = vcmask 60416
    %400 = vst.msk [vmem:[#allocation7] sm:$0xf] %vm399, %v396
    // Predicated region
    $region46: #{tpu_custom_call.1} parent=1 // pred_check
      _
    $region47: #{tpu_custom_call.1} parent=1 // pred_check_branch
      %402 = sbr.rel (0) target = $region49
    $region48: #{tpu_custom_call.1} parent=1 // pred_region
      %s404 = ssub.s32 64, 64
      %405 = vsyncadd [#allocation4], %s404
      %s407 = sshll.u32 [#allocation7], 4
      %s408 = int_to_ptr.vmem [resolvable:$true] %s407
      %410 = dma.vmem_to_hbm [thread:$0]  %s408, 64, %s9, [#allocation4]
    $region49: #{tpu_custom_call.1} parent=1 // pred_fallthru
      _
    // Predicated region
    $region50: #{tpu_custom_call.1} parent=1 // pred_check
      _
    $region51: #{tpu_custom_call.1} parent=1 // pred_check_branch
      %412 = sbr.rel (0) target = $region53
    $region52: #{tpu_custom_call.1} parent=1 // pred_region
      %413 = dma.done [#allocation4], 64
    $region53: #{tpu_custom_call.1} parent=1 // pred_fallthru
      _
    %414 = vsyncpa [#allocation3], 1
    %415 = vsyncpa [#allocation6], 1
    %416 = vsyncpa [#allocation4], 1

</llo_original>
